<compile_context>
chip_gen: v7x
topology: tpu7x:2x2x1
jax: 0.10.0
libtpu: 0.0.40
codegen_flags: <defaults>
</compile_context>

<pallas_src>
import functools

import numpy as np

import jax
import jax.numpy as jnp
from jax.experimental import pallas as pl
from jax.experimental.pallas import tpu as pltpu


# --------------------------------------------------------------------------
# Fused kernel.
# Inputs:
#   idx_ref  : SMEM (1,)  int32   -- last valid token index (T-1)
#   coef_ref : SMEM (3,)  float32 -- [c_out, c_datum, c_tijd]
#   x_ref    : VMEM (T_pad, E)    -- token embeddings (zero / junk rows past T-1)
#   datum_ref: VMEM (1, 2H)       -- claimDate/evidenceDate row
#   tijd_ref : VMEM (1, 2H)       -- accumulated verschil embeddings (or zeros)
#   w_ref    : VMEM (L, Dpack, 6H)-- packed per-layer weights [i_f|i_b|o_f|o_b|g_f|g_b]
#   b_ref    : VMEM (L, 1, 6H)    -- packed per-layer biases (b_ih + b_hh)
#   out_ref  : VMEM (1, 2H)
# --------------------------------------------------------------------------
def _fused_encoder_kernel(idx_ref, coef_ref, x_ref, datum_ref, tijd_ref,
                          w_ref, b_ref, out_ref):
    L, dpack, six_h = w_ref.shape
    H = six_h // 6
    T_pad, E = x_ref.shape

    last = idx_ref[0]                                        # T - 1 (runtime scalar)

    # F.normalize(x, p=2, dim=token): per-embedding-column L2 norm over valid rows.
    x = x_ref[...]                                           # (T_pad, E)
    row_ids = jax.lax.broadcasted_iota(jnp.int32, (T_pad, 1), 0)
    x = jnp.where(row_ids <= last, x, 0.0)                   # mask padding rows
    sumsq = jnp.sum(x * x, axis=0, keepdims=True)            # (1, E)   (XLU reduce)
    inv = jax.lax.rsqrt(jnp.maximum(sumsq, 1e-24))           # == 1/max(||col||,1e-12), EUP

    # Single-row collapse: only row T-1 (forward) and row 0 (backward) matter.
    x_last = x_ref[pl.ds(last, 1), :]                        # (1, E) = x[T-1]
    x_first = x_ref[0:1, :]                                  # (1, E) = x[0]
    row_f = jnp.maximum(x_last * inv, 0.0)                   # dropout (eval) == ReLU
    row_b = jnp.maximum(x_first * inv, 0.0)
    inp = jnp.concatenate([row_f, row_b], axis=1)            # (1, 2E) packed input
    if dpack > 2 * E:
        inp = jnp.concatenate(
            [inp, jnp.zeros((1, dpack - 2 * E), jnp.float32)], axis=1)

    skip_acc = jnp.zeros((1, 2 * H), jnp.float32)
    cur = None
    for i in range(L):
        if i > 0:
            r = jnp.maximum(cur, 0.0)                        # dropout(h_{i-1})
            skip_acc = skip_acc + r                          # += skip(h_{i-1})
            nxt = r + skip_acc                               # matches torch: h_{i-1} counted twice
            if dpack > 2 * H:
                nxt = jnp.concatenate(
                    [nxt, jnp.zeros((1, dpack - 2 * H), jnp.float32)], axis=1)
            inp = nxt
        # One MXU op per layer: (1, Dpack) @ (Dpack, 6H); forget gate dropped (f*c0 = 0).
        gates = jnp.dot(inp, w_ref[i], preferred_element_type=jnp.float32) + b_ref[i]
        sig = jax.nn.sigmoid(gates[:, 0:4 * H])              # [i_f|i_b|o_f|o_b] one block
        g = jnp.tanh(gates[:, 4 * H:6 * H])                  # [g_f|g_b]
        cur = sig[:, 2 * H:4 * H] * jnp.tanh(sig[:, 0:2 * H] * g)   # (1,2H)=[h_f|h_b]

    out_vec = jnp.maximum(cur, 0.0)                          # cat(relu(fwd[-1]), relu(bwd[-1]))
    out_ref[...] = (coef_ref[0] * out_vec
                    + coef_ref[1] * datum_ref[...]
                    + coef_ref[2] * tijd_ref[...])


@jax.jit
def _run_fused(idx, coefs, x_pad, datum, tijd, w_slab, b_slab):
    H = w_slab.shape[2] // 6
    smem = pl.BlockSpec(memory_space=pltpu.MemorySpace.SMEM)
    vmem = pl.BlockSpec(memory_space=pltpu.MemorySpace.VMEM)
    return pl.pallas_call(
        _fused_encoder_kernel,
        out_shape=jax.ShapeDtypeStruct((1, 2 * H), jnp.float32),
        in_specs=[smem, smem, vmem, vmem, vmem, vmem, vmem],
        out_specs=vmem,
    )(idx, coefs, x_pad, datum, tijd, w_slab, b_slab)


# --------------------------------------------------------------------------
# Deterministic parameter construction (shapes from encoder.__init__).
# Per-layer fwd+bwd LSTM weights are packed into one block-structured
# (Dpack, 6H) matrix with gate-major columns [i_f|i_b|o_f|o_b|g_f|g_b]
# (forget gate dropped: c0 = 0), stacked into a single (L, Dpack, 6H) slab.
# --------------------------------------------------------------------------
def init_params(key, vocab_size, embedding_dim, hidden_dim, number_layers):
    params = {}
    n_keys = 6 + 6 * number_layers
    keys = list(jax.random.split(key, n_keys))

    def xavier(k, shape):
        bound = (6.0 / (shape[0] + shape[1])) ** 0.5
        return jax.random.uniform(k, shape, jnp.float32, -bound, bound)

    params["word_embeds"] = xavier(keys.pop(), (vocab_size, embedding_dim))
    params["positionEmbeddings"] = jax.random.normal(keys.pop(), (200, embedding_dim)) * 0.02
    params["predicateEmbeddings"] = jax.random.normal(keys.pop(), (2, embedding_dim)) * 0.02
    params["verschil"] = jax.random.normal(keys.pop(), (86, 2 * hidden_dim)) * 0.02
    params["claimDate"] = jax.random.normal(keys.pop(), (2, 2 * hidden_dim)) * 0.02
    params["evidenceDate"] = jax.random.normal(keys.pop(), (65, 2 * hidden_dim)) * 0.02

    H, E = hidden_dim, embedding_dim
    k_scale = 1.0 / (H ** 0.5)
    dpack = ((2 * max(E, H) + 7) // 8) * 8

    def direction(kw, kb1, kb2, input_size):
        # PyTorch LSTM: weight_ih (4H, Din), bias_ih (4H,), bias_hh (4H,),
        # gate row order [i | f | g | o].  weight_hh irrelevant: h0=0, seq_len=1.
        w_ih = jax.random.uniform(kw, (4 * H, input_size), jnp.float32, -k_scale, k_scale)
        b_ih = jax.random.uniform(kb1, (4 * H,), jnp.float32, -k_scale, k_scale)
        b_hh = jax.random.uniform(kb2, (4 * H,), jnp.float32, -k_scale, k_scale)
        return jnp.transpose(w_ih), b_ih + b_hh              # (Din, 4H), (4H,)

    gate_pos = {"i": 0, "f": 1, "g": 2, "o": 3}              # PyTorch row offsets
    packed_order = ["i", "o", "g"]                           # sigmoid block first, tanh last

    w_slab = jnp.zeros((number_layers, dpack, 6 * H), jnp.float32)
    b_slab = jnp.zeros((number_layers, 1, 6 * H), jnp.float32)
    for i in range(number_layers):
        Din = E if i == 0 else H
        wf, bf = direction(keys.pop(), keys.pop(), keys.pop(), Din)   # forward dir
        wb, bb = direction(keys.pop(), keys.pop(), keys.pop(), Din)   # backward dir
        for k, g in enumerate(packed_order):
            s = gate_pos[g] * H
            c0, c1, c2 = (2 * k) * H, (2 * k + 1) * H, (2 * k + 2) * H
            w_slab = w_slab.at[i, 0:Din, c0:c1].set(wf[:, s:s + H])
            w_slab = w_slab.at[i, Din:2 * Din, c1:c2].set(wb[:, s:s + H])
            b_slab = b_slab.at[i, 0, c0:c1].set(bf[s:s + H])
            b_slab = b_slab.at[i, 0, c1:c2].set(bb[s:s + H])
    params["w_slab"] = w_slab
    params["b_slab"] = b_slab
    return params


# --------------------------------------------------------------------------
# Forward pass (mirrors encoder.forward, eval mode).  One pallas_call; the
# jitted wrapper is compiled once per (T bucket, E, H, L) shape signature.
# --------------------------------------------------------------------------
def encoder_forward(params, token_ids, date, positions, verbs, times,
                    verschillenIndices, verschillenValues, sizePretext=0,
                    isClaim=True, *, alpha, beta, hidden_dim, number_layers):
    H = hidden_dim
    ids_np = np.asarray(jax.device_get(jnp.asarray(token_ids)), dtype=np.int32).reshape(-1)
    T = int(ids_np.shape[0])
    T_pad = max(8, ((T + 7) // 8) * 8)                       # bucketed, multiple of 8
    ids_pad = np.zeros((T_pad,), dtype=np.int32)
    ids_pad[:T] = ids_np

    # Single embedding gather (padded rows are masked inside the kernel).
    x_pad = params["word_embeds"][jnp.asarray(ids_pad)].astype(jnp.float32)   # (T_pad, E)

    # tijdAbsolute: Python string filtering exactly as torch, then ONE take+sum.
    tijd_idxs = []
    if verschillenIndices[0] != '':
        for i in range(len(verschillenIndices)):
            if (verschillenIndices[i] >= sizePretext
                    and verschillenValues[i].find('Duur') == -1
                    and verschillenValues[i].find('Refs') == -1):
                if verschillenValues[i].isdigit():
                    tijd_idxs.append(int(verschillenValues[i]))
            if i + 1 >= len(verschillenValues):
                break
    number = len(tijd_idxs)
    if number > 0:
        tijd = jnp.sum(params["verschil"][jnp.asarray(tijd_idxs, jnp.int32)],
                       axis=0, keepdims=True)
        c_out, c_dat, c_tijd = float(alpha), float(beta), (1.0 - alpha - beta) / number
    else:
        tijd = jnp.zeros((1, 2 * H), jnp.float32)
        c_out, c_dat, c_tijd = float(alpha), 1.0 - float(alpha), 0.0

    table = params["claimDate"] if isClaim else params["evidenceDate"]
    datum = table[int(date)][None, :].astype(jnp.float32)    # (1, 2H)

    # Runtime scalars (SMEM) -> no recompile when T / number / alpha / beta change.
    idx = jnp.asarray([T - 1], jnp.int32)
    coefs = jnp.asarray([c_out, c_dat, c_tijd], jnp.float32)

    out = _run_fused(idx, coefs, x_pad, datum, tijd,
                     params["w_slab"], params["b_slab"])
    return out.reshape(-1)                                   # (2 * hidden_dim,)


if __name__ == "__main__":
    embedding_dim = 32
    hidden_dim = 32
    number_layers = 2
    vocab_size = 100
    seq_len = 8
    alpha, beta = 0.5, 0.3

    key = jax.random.PRNGKey(0)
    k_params, k_tok = jax.random.split(key)
    params = init_params(k_params, vocab_size, embedding_dim, hidden_dim, number_layers)
    token_ids = jax.random.randint(k_tok, (seq_len,), 0, vocab_size)

    result = encoder_forward(
        params, token_ids,
        date=1, positions=None, verbs=None, times=None,
        verschillenIndices=[2, 5, 7],
        verschillenValues=['3', 'Duur12', '10'],
        sizePretext=1, isClaim=True,
        alpha=alpha, beta=beta,
        hidden_dim=hidden_dim, number_layers=number_layers)

    jax.block_until_ready(result)
    assert result.shape == (2 * hidden_dim,)
    assert bool(jnp.all(jnp.isfinite(result)))
    print("KERNEL_OK")
</pallas_src>

<mosaic_0001>
module attributes {stable_mosaic.version = 11 : i64} {
  func.func @_fused_encoder_kernel(%arg0: memref<1xi32, #tpu.memory_space<smem>>, %arg1: memref<3xf32, #tpu.memory_space<smem>>, %arg2: memref<8x32xf32, #tpu.memory_space<vmem>>, %arg3: memref<1x64xf32, #tpu.memory_space<vmem>>, %arg4: memref<1x64xf32, #tpu.memory_space<vmem>>, %arg5: memref<2x64x192xf32, #tpu.memory_space<vmem>>, %arg6: memref<2x1x192xf32, #tpu.memory_space<vmem>>, %arg7: memref<1x64xf32, #tpu.memory_space<vmem>>) attributes {dimension_semantics = [], scalar_prefetch = 0 : i64, scratch_operands = 0 : i64, tpu.core_type = #tpu.core_type<tc>} {
    %c0 = arith.constant 0 : index
    %0 = memref.load %arg0[%c0] : memref<1xi32, #tpu.memory_space<smem>>
    %c0_0 = arith.constant 0 : index
    %c0_1 = arith.constant 0 : index
    %1 = vector.load %arg2[%c0_0, %c0_1] : memref<8x32xf32, #tpu.memory_space<vmem>>, vector<8x32xf32>
    %2 = tpu.iota {dimensions = array<i32: 0>} : vector<8x1xi32>
    %3 = vector.broadcast %0 : i32 to vector<8x1xi32>
    %4 = arith.cmpi sle, %2, %3 : vector<8x1xi32>
    %cst = arith.constant 0.000000e+00 : f32
    %5 = vector.shape_cast %4 : vector<8x1xi1> to vector<8x1xi1>
    %6 = vector.broadcast %5 : vector<8x1xi1> to vector<8x32xi1>
    %7 = vector.broadcast %cst : f32 to vector<8x32xf32>
    %8 = arith.select %6, %1, %7 : vector<8x32xi1>, vector<8x32xf32>
    %9 = arith.mulf %8, %8 : vector<8x32xf32>
    %cst_2 = arith.constant dense<0.000000e+00> : vector<32xf32>
    %10 = vector.multi_reduction <add>, %9, %cst_2 [0] : vector<8x32xf32> to vector<32xf32>
    %11 = vector.shape_cast %10 : vector<32xf32> to vector<1x32xf32>
    %cst_3 = arith.constant 1.000000e-24 : f32
    %12 = vector.broadcast %cst_3 : f32 to vector<1x32xf32>
    %13 = arith.maximumf %11, %12 : vector<1x32xf32>
    %14 = math.rsqrt %13 : vector<1x32xf32>
    %15 = arith.index_cast %0 : i32 to index
    %c0_4 = arith.constant 0 : index
    %16 = vector.load %arg2[%15, %c0_4] : memref<8x32xf32, #tpu.memory_space<vmem>>, vector<1x32xf32>
    %c0_5 = arith.constant 0 : index
    %c0_6 = arith.constant 0 : index
    %17 = vector.load %arg2[%c0_5, %c0_6] : memref<8x32xf32, #tpu.memory_space<vmem>>, vector<1x32xf32>
    %18 = arith.mulf %16, %14 : vector<1x32xf32>
    %cst_7 = arith.constant 0.000000e+00 : f32
    %19 = vector.broadcast %cst_7 : f32 to vector<1x32xf32>
    %20 = arith.maximumf %18, %19 : vector<1x32xf32>
    %21 = arith.mulf %17, %14 : vector<1x32xf32>
    %cst_8 = arith.constant 0.000000e+00 : f32
    %22 = vector.broadcast %cst_8 : f32 to vector<1x32xf32>
    %23 = arith.maximumf %21, %22 : vector<1x32xf32>
    %24 = tpu.concatenate %20, %23 in 1 : vector<1x32xf32>, vector<1x32xf32> -> vector<1x64xf32>
    %cst_9 = arith.constant 0.000000e+00 : f32
    %25 = vector.broadcast %cst_9 : f32 to vector<1x64xf32>
    %c0_10 = arith.constant 0 : index
    %c0_11 = arith.constant 0 : index
    %c0_12 = arith.constant 0 : index
    %26 = vector.load %arg5[%c0_10, %c0_11, %c0_12] : memref<2x64x192xf32, #tpu.memory_space<vmem>>, vector<1x64x192xf32>
    %27 = vector.shape_cast %26 : vector<1x64x192xf32> to vector<64x192xf32>
    %cst_13 = arith.constant dense<0.000000e+00> : vector<1x192xf32>
    %28 = tpu.matmul %24, %27, %cst_13 {dimension_numbers = #tpu.dot_dimension_numbers<[1], [0], [0], [1], [0, 0, 1, 1], [], []>} : vector<1x64xf32>, vector<64x192xf32>, vector<1x192xf32> -> vector<1x192xf32>
    %c0_14 = arith.constant 0 : index
    %c0_15 = arith.constant 0 : index
    %c0_16 = arith.constant 0 : index
    %29 = vector.load %arg6[%c0_14, %c0_15, %c0_16] : memref<2x1x192xf32, #tpu.memory_space<vmem>>, vector<1x1x192xf32>
    %30 = vector.shape_cast %29 : vector<1x1x192xf32> to vector<1x192xf32>
    %31 = arith.addf %28, %30 : vector<1x192xf32>
    %32 = vector.extract_strided_slice %31 {offsets = [0, 0], sizes = [1, 128], strides = [1, 1]} : vector<1x192xf32> to vector<1x128xf32>
    %33 = arith.negf %32 : vector<1x128xf32>
    %34 = math.exp %33 : vector<1x128xf32>
    %cst_17 = arith.constant 1.000000e+00 : f32
    %35 = vector.broadcast %cst_17 : f32 to vector<1x128xf32>
    %36 = arith.addf %35, %34 : vector<1x128xf32>
    %37 = arith.divf %35, %36 : vector<1x128xf32>
    %38 = vector.extract_strided_slice %31 {offsets = [0, 128], sizes = [1, 64], strides = [1, 1]} : vector<1x192xf32> to vector<1x64xf32>
    %39 = math.tanh %38 : vector<1x64xf32>
    %40 = vector.extract_strided_slice %37 {offsets = [0, 64], sizes = [1, 64], strides = [1, 1]} : vector<1x128xf32> to vector<1x64xf32>
    %41 = vector.extract_strided_slice %37 {offsets = [0, 0], sizes = [1, 64], strides = [1, 1]} : vector<1x128xf32> to vector<1x64xf32>
    %42 = arith.mulf %41, %39 : vector<1x64xf32>
    %43 = math.tanh %42 : vector<1x64xf32>
    %44 = arith.mulf %40, %43 : vector<1x64xf32>
    %cst_18 = arith.constant 0.000000e+00 : f32
    %45 = vector.broadcast %cst_18 : f32 to vector<1x64xf32>
    %46 = arith.maximumf %44, %45 : vector<1x64xf32>
    %47 = arith.addf %25, %46 : vector<1x64xf32>
    %48 = arith.addf %46, %47 : vector<1x64xf32>
    %c1 = arith.constant 1 : index
    %c0_19 = arith.constant 0 : index
    %c0_20 = arith.constant 0 : index
    %49 = vector.load %arg5[%c1, %c0_19, %c0_20] : memref<2x64x192xf32, #tpu.memory_space<vmem>>, vector<1x64x192xf32>
    %50 = vector.shape_cast %49 : vector<1x64x192xf32> to vector<64x192xf32>
    %cst_21 = arith.constant dense<0.000000e+00> : vector<1x192xf32>
    %51 = tpu.matmul %48, %50, %cst_21 {dimension_numbers = #tpu.dot_dimension_numbers<[1], [0], [0], [1], [0, 0, 1, 1], [], []>} : vector<1x64xf32>, vector<64x192xf32>, vector<1x192xf32> -> vector<1x192xf32>
    %c1_22 = arith.constant 1 : index
    %c0_23 = arith.constant 0 : index
    %c0_24 = arith.constant 0 : index
    %52 = vector.load %arg6[%c1_22, %c0_23, %c0_24] : memref<2x1x192xf32, #tpu.memory_space<vmem>>, vector<1x1x192xf32>
    %53 = vector.shape_cast %52 : vector<1x1x192xf32> to vector<1x192xf32>
    %54 = arith.addf %51, %53 : vector<1x192xf32>
    %55 = vector.extract_strided_slice %54 {offsets = [0, 0], sizes = [1, 128], strides = [1, 1]} : vector<1x192xf32> to vector<1x128xf32>
    %56 = arith.negf %55 : vector<1x128xf32>
    %57 = math.exp %56 : vector<1x128xf32>
    %cst_25 = arith.constant 1.000000e+00 : f32
    %58 = vector.broadcast %cst_25 : f32 to vector<1x128xf32>
    %59 = arith.addf %58, %57 : vector<1x128xf32>
    %60 = arith.divf %58, %59 : vector<1x128xf32>
    %61 = vector.extract_strided_slice %54 {offsets = [0, 128], sizes = [1, 64], strides = [1, 1]} : vector<1x192xf32> to vector<1x64xf32>
    %62 = math.tanh %61 : vector<1x64xf32>
    %63 = vector.extract_strided_slice %60 {offsets = [0, 64], sizes = [1, 64], strides = [1, 1]} : vector<1x128xf32> to vector<1x64xf32>
    %64 = vector.extract_strided_slice %60 {offsets = [0, 0], sizes = [1, 64], strides = [1, 1]} : vector<1x128xf32> to vector<1x64xf32>
    %65 = arith.mulf %64, %62 : vector<1x64xf32>
    %66 = math.tanh %65 : vector<1x64xf32>
    %67 = arith.mulf %63, %66 : vector<1x64xf32>
    %cst_26 = arith.constant 0.000000e+00 : f32
    %68 = vector.broadcast %cst_26 : f32 to vector<1x64xf32>
    %69 = arith.maximumf %67, %68 : vector<1x64xf32>
    %c0_27 = arith.constant 0 : index
    %70 = memref.load %arg1[%c0_27] : memref<3xf32, #tpu.memory_space<smem>>
    %71 = vector.broadcast %70 : f32 to vector<1x64xf32>
    %72 = arith.mulf %71, %69 : vector<1x64xf32>
    %c1_28 = arith.constant 1 : index
    %73 = memref.load %arg1[%c1_28] : memref<3xf32, #tpu.memory_space<smem>>
    %c0_29 = arith.constant 0 : index
    %c0_30 = arith.constant 0 : index
    %74 = vector.load %arg3[%c0_29, %c0_30] : memref<1x64xf32, #tpu.memory_space<vmem>>, vector<1x64xf32>
    %75 = vector.broadcast %73 : f32 to vector<1x64xf32>
    %76 = arith.mulf %75, %74 : vector<1x64xf32>
    %77 = arith.addf %72, %76 : vector<1x64xf32>
    %c2 = arith.constant 2 : index
    %78 = memref.load %arg1[%c2] : memref<3xf32, #tpu.memory_space<smem>>
    %c0_31 = arith.constant 0 : index
    %c0_32 = arith.constant 0 : index
    %79 = vector.load %arg4[%c0_31, %c0_32] : memref<1x64xf32, #tpu.memory_space<vmem>>, vector<1x64xf32>
    %80 = vector.broadcast %78 : f32 to vector<1x64xf32>
    %81 = arith.mulf %80, %79 : vector<1x64xf32>
    %82 = arith.addf %77, %81 : vector<1x64xf32>
    %c0_33 = arith.constant 0 : index
    %c0_34 = arith.constant 0 : index
    %83 = vector.load %arg7[%c0_33, %c0_34] : memref<1x64xf32, #tpu.memory_space<vmem>>, vector<1x64xf32>
    tpu.vector_store %arg7[%c0_33, %c0_34], %82 {strides = array<i32>} : memref<1x64xf32, #tpu.memory_space<vmem>>, vector<1x64xf32>,
    return
  }
}

</mosaic_0001>

<llo_original>
// kernel: _run_fused.1
$region0: #{_run_fused.1}
  #allocation0 [shape = 'u32[]', space=smem, size = 0x4, offset = 0x4, fixed_abs, tag = 'smem constant byte address 0x4 - core index']
  #allocation1 [shape = 'u32[144,128]{1,0:T(1,128)}', space=vmem, size = 0x12000, scoped, tag = 'internal scratch']
  #allocation2 [shape = 's32[1]{0:T(128)S(6)}', space=smem, size = 0x200, scoped, tag = 'scoped memory for _run_fused.1']
  %s0 = inlined_call_operand.<no memory space> [shape: s32[1], index: 0, kind: input, shape index: {}]
  %s1 = inlined_call_operand.vmem [shape: f32[3], index: 1, kind: input, shape index: {}]
  %s2 = inlined_call_operand.hbm [shape: f32[8,32], index: 2, kind: input, shape index: {}]
  %s3 = inlined_call_operand.vmem [shape: f32[1,64], index: 3, kind: input, shape index: {}]
  %s4 = inlined_call_operand.vmem [shape: f32[1,64], index: 4, kind: input, shape index: {}]
  %s5 = inlined_call_operand.hbm [shape: f32[2,64,192], index: 5, kind: input, shape index: {}]
  %s6 = inlined_call_operand.vmem [shape: f32[2,1,192], index: 6, kind: input, shape index: {}]
  %s7 = inlined_call_operand.hbm [shape: f32[1,64], index: 7, kind: output, shape index: {}]
  %s8 = sld [smem:[#allocation0]]
  $region50: #{_run_fused.1} parent=0
    _
  %s10 = ssub.s32 1, %s8
  %s11 = scalar_select 0, %s10, %s8
  %12 = sst [smem:[#allocation2]] %s0
  $region1: #{_run_fused.1} parent=0
    #allocation3 [shape = 'u8[512]{0}', space=smem, size = 0x200, scoped, tag = 'input window, operand 1, single buffered']
    #allocation4 [shape = 's32[1]{0}', space=sflag, size = 0x4, scoped, tag = 'scoped memory for _run_fused.1']
    #allocation5 [shape = 's32[1]{0}', space=sflag, size = 0x4, scoped, tag = 'scoped memory for _run_fused.1']
    #allocation6 [shape = 's32[1]{0}', space=sflag, size = 0x4, scoped, tag = 'scoped memory for _run_fused.1']
    #allocation7 [shape = 'u8[4096]{0}', space=vmem, size = 0x1000, scoped, tag = 'input window, operand 2, single buffered']
    #allocation8 [shape = 'u8[131072]{0}', space=vmem, size = 0x20000, scoped, tag = 'input window, operand 5, single buffered']
    #allocation9 [shape = 's32[1]{0}', space=sflag, size = 0x4, scoped, tag = 'scoped memory for _run_fused.1']
    #allocation10 [shape = 'u8[512]{0}', space=vmem, size = 0x400, scoped, tag = 'output window, operand 0, single buffered']
    %13 = vsyncpa [#allocation6], 0
    %14 = vsyncpa [#allocation4], 0
    %15 = vsyncpa [#allocation9], 0
    %16 = vsyncpa [#allocation5], 0
    // Predicated region
    $region2: #{_run_fused.1} parent=1 // pred_check
      _
    $region3: #{_run_fused.1} parent=1 // pred_check_branch
      %18 = sbr.rel (0) target = $region5
    $region4: #{_run_fused.1} parent=1 // pred_region
      _
    $region5: #{_run_fused.1} parent=1 // pred_fallthru
      _
    // Predicated region
    $region6: #{_run_fused.1} parent=1 // pred_check
      _
    $region7: #{_run_fused.1} parent=1 // pred_check_branch
      %20 = sbr.rel (0) target = $region9
    $region8: #{_run_fused.1} parent=1 // pred_region
      %s22 = ssub.s32 16, 16
      %23 = vsyncadd [#allocation6], %s22
      %s25 = sshll.u32 %s1, 4
      %s26 = int_to_ptr.vmem [resolvable:$true] %s25
      %28 = dma.vmem_to_smem %s26, 16, [#allocation3], [#allocation6]
    $region9: #{_run_fused.1} parent=1 // pred_fallthru
      _
    // Predicated region
    $region10: #{_run_fused.1} parent=1 // pred_check
      _
    $region11: #{_run_fused.1} parent=1 // pred_check_branch
      %30 = sbr.rel (0) target = $region13
    $region12: #{_run_fused.1} parent=1 // pred_region
      %s32 = ssub.s32 128, 128
      %33 = vsyncadd [#allocation4], %s32
      %s35 = sshll.u32 [#allocation7], 4
      %s36 = int_to_ptr.vmem [resolvable:$true] %s35
      %38 = dma.hbm_to_vmem [thread:$0]  %s2, 128, %s36, [#allocation4]
    $region13: #{_run_fused.1} parent=1 // pred_fallthru
      _
    // Predicated region
    $region14: #{_run_fused.1} parent=1 // pred_check
      _
    $region15: #{_run_fused.1} parent=1 // pred_check_branch
      %40 = sbr.rel (0) target = $region17
    $region16: #{_run_fused.1} parent=1 // pred_region
      _
    $region17: #{_run_fused.1} parent=1 // pred_fallthru
      _
    // Predicated region
    $region18: #{_run_fused.1} parent=1 // pred_check
      _
    $region19: #{_run_fused.1} parent=1 // pred_check_branch
      %42 = sbr.rel (0) target = $region21
    $region20: #{_run_fused.1} parent=1 // pred_region
      _
    $region21: #{_run_fused.1} parent=1 // pred_fallthru
      _
    // Predicated region
    $region22: #{_run_fused.1} parent=1 // pred_check
      _
    $region23: #{_run_fused.1} parent=1 // pred_check_branch
      %44 = sbr.rel (0) target = $region25
    $region24: #{_run_fused.1} parent=1 // pred_region
      %s46 = ssub.s32 4096, 4096
      %47 = vsyncadd [#allocation9], %s46
      %s48 = sshll.u32 [#allocation8], 4
      %s49 = int_to_ptr.vmem [resolvable:$true] %s48
      %54 = dma.hbm_to_vmem [thread:$0]  %s5, 4096, %s49, [#allocation9], 256, 256, 16
    $region25: #{_run_fused.1} parent=1 // pred_fallthru
      _
    // Predicated region
    $region26: #{_run_fused.1} parent=1 // pred_check
      _
    $region27: #{_run_fused.1} parent=1 // pred_check_branch
      %56 = sbr.rel (0) target = $region29
    $region28: #{_run_fused.1} parent=1 // pred_region
      _
    $region29: #{_run_fused.1} parent=1 // pred_fallthru
      _
    // Predicated region
    $region30: #{_run_fused.1} parent=1 // pred_check
      _
    $region31: #{_run_fused.1} parent=1 // pred_check_branch
      %58 = sbr.rel (0) target = $region33
    $region32: #{_run_fused.1} parent=1 // pred_region
      %59 = dma.done [#allocation6], 16
    $region33: #{_run_fused.1} parent=1 // pred_fallthru
      _
    // Predicated region
    $region34: #{_run_fused.1} parent=1 // pred_check
      _
    $region35: #{_run_fused.1} parent=1 // pred_check_branch
      %61 = sbr.rel (0) target = $region37
    $region36: #{_run_fused.1} parent=1 // pred_region
      %62 = dma.done [#allocation4], 128
    $region37: #{_run_fused.1} parent=1 // pred_fallthru
      _
    // Predicated region
    $region38: #{_run_fused.1} parent=1 // pred_check
      _
    $region39: #{_run_fused.1} parent=1 // pred_check_branch
      %64 = sbr.rel (0) target = $region41
    $region40: #{_run_fused.1} parent=1 // pred_region
      %65 = dma.done [#allocation9], 4096
    $region41: #{_run_fused.1} parent=1 // pred_fallthru
      _
    %66 = sfence
    %s67 = sld [smem:[#allocation2]]
    %v68 = vld [vmem:[#allocation7] sm:$0xff]
    %v69 = vlaneseq
    %v70 = vshrl.u32 %v69, 7
    %v71 = vstv %s67
    %vm72 = vcmp.le.s32.totalorder %v70, %v71
    %v73 = vsel %vm72, 1, 0
    %vm74 = vcmp.eq.s32.totalorder %v73, 1
    %v75 = vsel %vm74, %v68, 0.0
    %v76 = vmul.f32 %v75, %v75
    %vm77 = vcmask 261120
    %v78 = vsel %vm77, %v76, 0.0
    %v79 = vrot.slane %v78, 4
    %v80 = vadd.f32 %v78, %v79
    %v81 = vrot.slane %v80, 2
    %v82 = vadd.f32 %v80, %v81
    %v83 = vrot.slane %v82, 1
    %v84 = vadd.f32 %v82, %v83
    %v85 = vmax.f32 %v84, 1e-24
    %v86 = vrsqrt.pop %v85
    %s87 = scalar_lea.vmem [#allocation7], %s67
    %v88 = vld [vmem:[%s87] sm:$0x1]
    %v89 = vld [vmem:[#allocation7] sm:$0x1]
    %v90 = vmul.f32 %v88, %v86
    %v91 = vmax.f32 %v90, 0.0
    %v92 = vmul.f32 %v89, %v86
    %v93 = vmax.f32 %v92, 0.0
    %95 = vrot.lane.b32.xlu0 %v93, 32
    %v96 = vpop.permute.xlu0 %95
    %v98 = vsel %vm77, %v91, %v96
    %v99 = vld [vmem:[#allocation8] sm:$0xff]
    %v100 = vld [vmem:[#allocation8 + $0x8] sm:$0xff]
    %v101 = vld [vmem:[#allocation8 + $0x10] sm:$0xff]
    %v102 = vld [vmem:[#allocation8 + $0x18] sm:$0xff]
    %v103 = vld [vmem:[#allocation8 + $0x20] sm:$0xff]
    %v104 = vld [vmem:[#allocation8 + $0x28] sm:$0xff]
    %v105 = vld [vmem:[#allocation8 + $0x30] sm:$0xff]
    %v106 = vld [vmem:[#allocation8 + $0x38] sm:$0xff]
    %v107 = vld [vmem:[#allocation8 + $0x40] sm:$0xff]
    %v108 = vld [vmem:[#allocation8 + $0x48] sm:$0xff]
    %v109 = vld [vmem:[#allocation8 + $0x50] sm:$0xff]
    %v110 = vld [vmem:[#allocation8 + $0x58] sm:$0xff]
    %v111 = vld [vmem:[#allocation8 + $0x60] sm:$0xff]
    %v112 = vld [vmem:[#allocation8 + $0x68] sm:$0xff]
    %v113 = vld [vmem:[#allocation8 + $0x70] sm:$0xff]
    %v114 = vld [vmem:[#allocation8 + $0x78] sm:$0xff]
    %v115 = vld [vmem:[%s6] sm:$0x3]
    %v117 = vlaneseq
    %v118 = vshrl.u32 %v117, 7
    %v119 = vsub.s32 0, %v118
    %v120 = vrot.slane %v115, %v119
    %v121 = vlaneseq
    %v122 = vshrl.u32 %v121, 7
    %v123 = vsub.s32 1, %v122
    %v124 = vrot.slane %v115, %v123
    %vm127 = vcmask 523264
    %v129 = vsel %vm127, %v98, 0
    %131 = vmatprep.subr.mxu0 %v100
    %132 = vmatpush1.msra.mxu0 %v99
    %133 = vmatprep.subr.mxu0 %v102
    %134 = vmatpush1.msra.mxu0 %v101
    %135 = vmatprep.subr.mxu0 %v104
    %136 = vmatpush1.msra.mxu0 %v103
    %137 = vmatprep.subr.mxu0 %v106
    %138 = vmatpush1.msra.mxu0 %v105
    %139 = vmatprep.subr.mxu0 %v108
    %140 = vmatpush1.msra.mxu0 %v107
    %141 = vmatprep.subr.mxu0 %v110
    %142 = vmatpush1.msra.mxu0 %v109
    %143 = vmatprep.subr.mxu0 %v112
    %144 = vmatpush1.msra.mxu0 %v111
    %145 = vmatprep.subr.mxu0 %v114
    %146 = vmatpush1.msra.mxu0 %v113
    %147 = vmatprep.subr.mxu0 0.0
    %148 = vmatpush1.msra.mxu0 0.0
    %149 = vmatprep.subr.mxu0 0.0
    %150 = vmatpush1.msra.mxu0 0.0
    %151 = vmatprep.subr.mxu0 0.0
    %152 = vmatpush1.msra.mxu0 0.0
    %153 = vmatprep.subr.mxu0 0.0
    %154 = vmatpush1.msra.mxu0 0.0
    %155 = vmatprep.subr.mxu0 0.0
    %156 = vmatpush1.msra.mxu0 0.0
    %157 = vmatprep.subr.mxu0 0.0
    %158 = vmatpush1.msra.mxu0 0.0
    %159 = vmatprep.subr.mxu0 0.0
    %160 = vmatpush1.msra.mxu0 0.0
    %161 = vmatprep.subr.mxu0 0.0
    %162 = vmatpush1.msra.mxu0 0.0
    %163 = vmatprep.subr.mxu0 0.0
    %164 = vmatpush1.msra.mxu0 0.0
    %165 = vmatprep.subr.mxu0 0.0
    %166 = vmatpush1.msra.mxu0 0.0
    %167 = vmatprep.subr.mxu0 0.0
    %168 = vmatpush1.msra.mxu0 0.0
    %169 = vmatprep.subr.mxu0 0.0
    %170 = vmatpush1.msra.mxu0 0.0
    %171 = vmatprep.subr.mxu0 0.0
    %172 = vmatpush1.msra.mxu0 0.0
    %173 = vmatprep.subr.mxu0 0.0
    %174 = vmatpush1.msra.mxu0 0.0
    %175 = vmatprep.subr.mxu0 0.0
    %176 = vmatpush1.msra.mxu0 0.0
    %177 = vmatprep.subr.mxu0 0.0
    %178 = vmatpush1.msra.mxu0 0.0
    %179 = vmatprep.subr.mxu0 0.0
    %180 = vmatpush1.msra.mxu0 0.0
    %181 = vmatprep.subr.mxu0 0.0
    %182 = vmatpush1.msra.mxu0 0.0
    %183 = vmatprep.subr.mxu0 0.0
    %184 = vmatpush1.msra.mxu0 0.0
    %185 = vmatprep.subr.mxu0 0.0
    %186 = vmatpush1.msra.mxu0 0.0
    %187 = vmatprep.subr.mxu0 0.0
    %188 = vmatpush1.msra.mxu0 0.0
    %189 = vmatprep.subr.mxu0 0.0
    %190 = vmatpush1.msra.mxu0 0.0
    %191 = vmatprep.subr.mxu0 0.0
    %192 = vmatpush1.msra.mxu0 0.0
    %193 = vmatprep.subr.mxu0 0.0
    %194 = vmatpush1.msra.mxu0 0.0
    %195 = vmatprep.mubr.f32.mxu0 0.0
    %196 = vmatmul.mubr.f32.gmra.mrb[0].mxu0 %v129
    %v197 = vpop.f32.mrb[0].mxu0
    %v198 = vadd.f32 %v120, %v197
    %v199 = vpop.f32.mrb[0].mxu0
    %v200 = vadd.f32 %v124, %v199
    %201 = vdwg.mxu0
    %v202 = vxor.u32 %v198, 2147483648
    %v203 = vmul.f32 %v202, 1.442695
    %v204 = vpow.pop %v203
    %v205 = vadd.f32 %v204, 1.0
    %v206 = vrcp.pop %v205
    %v207 = vmul.f32 1.0, %v206
    %v208 = vtanh.pop %v200
    %v209 = vmul.f32 %v207, %v208
    %v210 = vtanh.pop %v209
    %212 = vrot.lane.b32.xlu0 %v210, 64
    %v213 = vpop.permute.xlu0 %212
    %v215 = vmul.f32 %v207, %v213
    %v216 = vmax.f32 %v215, 0.0
    %v217 = vadd.f32 %v216, 0.0
    %v218 = vadd.f32 %v216, %v217
    %s219 = scalar_lea.vmem [#allocation8], 128
    %v220 = vld [vmem:[%s219] sm:$0xff]
    %v221 = vld [vmem:[%s219 + $0x8] sm:$0xff]
    %v222 = vld [vmem:[%s219 + $0x10] sm:$0xff]
    %v223 = vld [vmem:[%s219 + $0x18] sm:$0xff]
    %v224 = vld [vmem:[%s219 + $0x20] sm:$0xff]
    %v225 = vld [vmem:[%s219 + $0x28] sm:$0xff]
    %v226 = vld [vmem:[%s219 + $0x30] sm:$0xff]
    %v227 = vld [vmem:[%s219 + $0x38] sm:$0xff]
    %v228 = vld [vmem:[%s219 + $0x40] sm:$0xff]
    %v229 = vld [vmem:[%s219 + $0x48] sm:$0xff]
    %v230 = vld [vmem:[%s219 + $0x50] sm:$0xff]
    %v231 = vld [vmem:[%s219 + $0x58] sm:$0xff]
    %v232 = vld [vmem:[%s219 + $0x60] sm:$0xff]
    %v233 = vld [vmem:[%s219 + $0x68] sm:$0xff]
    %v234 = vld [vmem:[%s219 + $0x70] sm:$0xff]
    %v235 = vld [vmem:[%s219 + $0x78] sm:$0xff]
    %s236 = scalar_lea.vmem %s6, 2
    %v237 = vld [vmem:[%s236] sm:$0x3]
    %239 = vrot.lane.b32.xlu0 %v218, 64
    %v240 = vpop.permute.xlu0 %239
    %v242 = vlaneseq
    %v243 = vshrl.u32 %v242, 7
    %v244 = vsub.s32 0, %v243
    %v245 = vrot.slane %v237, %v244
    %v246 = vlaneseq
    %v247 = vshrl.u32 %v246, 7
    %v248 = vsub.s32 1, %v247
    %v249 = vrot.slane %v237, %v248
    %v252 = vsel %vm127, %v240, 0
    %254 = vmatprep.subr.mxu0 %v221
    %255 = vmatpush1.msra.mxu0 %v220
    %256 = vmatprep.subr.mxu0 %v223
    %257 = vmatpush1.msra.mxu0 %v222
    %258 = vmatprep.subr.mxu0 %v225
    %259 = vmatpush1.msra.mxu0 %v224
    %260 = vmatprep.subr.mxu0 %v227
    %261 = vmatpush1.msra.mxu0 %v226
    %262 = vmatprep.subr.mxu0 %v229
    %263 = vmatpush1.msra.mxu0 %v228
    %264 = vmatprep.subr.mxu0 %v231
    %265 = vmatpush1.msra.mxu0 %v230
    %266 = vmatprep.subr.mxu0 %v233
    %267 = vmatpush1.msra.mxu0 %v232
    %268 = vmatprep.subr.mxu0 %v235
    %269 = vmatpush1.msra.mxu0 %v234
    %270 = vmatprep.subr.mxu0 0.0
    %271 = vmatpush1.msra.mxu0 0.0
    %272 = vmatprep.subr.mxu0 0.0
    %273 = vmatpush1.msra.mxu0 0.0
    %274 = vmatprep.subr.mxu0 0.0
    %275 = vmatpush1.msra.mxu0 0.0
    %276 = vmatprep.subr.mxu0 0.0
    %277 = vmatpush1.msra.mxu0 0.0
    %278 = vmatprep.subr.mxu0 0.0
    %279 = vmatpush1.msra.mxu0 0.0
    %280 = vmatprep.subr.mxu0 0.0
    %281 = vmatpush1.msra.mxu0 0.0
    %282 = vmatprep.subr.mxu0 0.0
    %283 = vmatpush1.msra.mxu0 0.0
    %284 = vmatprep.subr.mxu0 0.0
    %285 = vmatpush1.msra.mxu0 0.0
    %286 = vmatprep.subr.mxu0 0.0
    %287 = vmatpush1.msra.mxu0 0.0
    %288 = vmatprep.subr.mxu0 0.0
    %289 = vmatpush1.msra.mxu0 0.0
    %290 = vmatprep.subr.mxu0 0.0
    %291 = vmatpush1.msra.mxu0 0.0
    %292 = vmatprep.subr.mxu0 0.0
    %293 = vmatpush1.msra.mxu0 0.0
    %294 = vmatprep.subr.mxu0 0.0
    %295 = vmatpush1.msra.mxu0 0.0
    %296 = vmatprep.subr.mxu0 0.0
    %297 = vmatpush1.msra.mxu0 0.0
    %298 = vmatprep.subr.mxu0 0.0
    %299 = vmatpush1.msra.mxu0 0.0
    %300 = vmatprep.subr.mxu0 0.0
    %301 = vmatpush1.msra.mxu0 0.0
    %302 = vmatprep.subr.mxu0 0.0
    %303 = vmatpush1.msra.mxu0 0.0
    %304 = vmatprep.subr.mxu0 0.0
    %305 = vmatpush1.msra.mxu0 0.0
    %306 = vmatprep.subr.mxu0 0.0
    %307 = vmatpush1.msra.mxu0 0.0
    %308 = vmatprep.subr.mxu0 0.0
    %309 = vmatpush1.msra.mxu0 0.0
    %310 = vmatprep.subr.mxu0 0.0
    %311 = vmatpush1.msra.mxu0 0.0
    %312 = vmatprep.subr.mxu0 0.0
    %313 = vmatpush1.msra.mxu0 0.0
    %314 = vmatprep.subr.mxu0 0.0
    %315 = vmatpush1.msra.mxu0 0.0
    %316 = vmatprep.subr.mxu0 0.0
    %317 = vmatpush1.msra.mxu0 0.0
    %318 = vmatprep.mubr.f32.mxu0 0.0
    %319 = vmatmul.mubr.f32.gmra.mrb[0].mxu0 %v252
    %v320 = vpop.f32.mrb[0].mxu0
    %v321 = vadd.f32 %v245, %v320
    %v322 = vpop.f32.mrb[0].mxu0
    %v323 = vadd.f32 %v249, %v322
    %324 = vdwg.mxu0
    %v325 = vxor.u32 %v321, 2147483648
    %v326 = vmul.f32 %v325, 1.442695
    %v327 = vpow.pop %v326
    %v328 = vadd.f32 %v327, 1.0
    %v329 = vrcp.pop %v328
    %v330 = vmul.f32 1.0, %v329
    %v331 = vtanh.pop %v323
    %v332 = vmul.f32 %v330, %v331
    %v333 = vtanh.pop %v332
    %335 = vrot.lane.b32.xlu0 %v333, 64
    %v336 = vpop.permute.xlu0 %335
    %v338 = vmul.f32 %v330, %v336
    %v339 = vmax.f32 %v338, 0.0
    %s340 = sld [smem:[#allocation3]]
    %v341 = vstv %s340
    %v342 = vmul.f32 %v341, %v339
    %s343 = sld [smem:[#allocation3 + $0x1]]
    %v344 = vld [vmem:[%s3] sm:$0x1]
    %v345 = vstv %s343
    %v346 = vmul.f32 %v345, %v344
    %v348 = vlaneseq
    %v349 = vshrl.u32 %v348, 7
    %v350 = vsub.s32 0, %v349
    %v351 = vrot.slane %v346, %v350
    %352 = vrot.lane.b32.xlu0 %v351, 64
    %v353 = vpop.permute.xlu0 %352
    %v355 = vadd.f32 %v342, %v353
    %s356 = sld [smem:[#allocation3 + $0x2]]
    %v357 = vld [vmem:[%s4] sm:$0x1]
    %v358 = vstv %s356
    %v359 = vmul.f32 %v358, %v357
    %v361 = vlaneseq
    %v362 = vshrl.u32 %v361, 7
    %v363 = vsub.s32 0, %v362
    %v364 = vrot.slane %v359, %v363
    %365 = vrot.lane.b32.xlu0 %v364, 64
    %v366 = vpop.permute.xlu0 %365
    %v368 = vadd.f32 %v355, %v366
    %370 = vrot.lane.b32.xlu0 %v368, 64
    %v371 = vpop.permute.xlu0 %370
    %vm373 = vcmask 516096
    %374 = vst.msk [vmem:[#allocation10] sm:$0x1] %vm373, %v371
    // Predicated region
    $region42: #{_run_fused.1} parent=1 // pred_check
      _
    $region43: #{_run_fused.1} parent=1 // pred_check_branch
      %376 = sbr.rel (0) target = $region45
    $region44: #{_run_fused.1} parent=1 // pred_region
      %s378 = ssub.s32 16, 16
      %379 = vsyncadd [#allocation5], %s378
      %s381 = sshll.u32 [#allocation10], 4
      %s382 = int_to_ptr.vmem [resolvable:$true] %s381
      %384 = dma.vmem_to_hbm [thread:$0]  %s382, 16, %s7, [#allocation5]
    $region45: #{_run_fused.1} parent=1 // pred_fallthru
      _
    // Predicated region
    $region46: #{_run_fused.1} parent=1 // pred_check
      _
    $region47: #{_run_fused.1} parent=1 // pred_check_branch
      %386 = sbr.rel (0) target = $region49
    $region48: #{_run_fused.1} parent=1 // pred_region
      %387 = dma.done [#allocation5], 16
    $region49: #{_run_fused.1} parent=1 // pred_fallthru
      _
    %388 = vsyncpa [#allocation4], 1
    %389 = vsyncpa [#allocation9], 1
    %390 = vsyncpa [#allocation5], 1
    %391 = vsyncpa [#allocation6], 1

</llo_original>
